<compile_context>
chip_gen: v6e
topology: v6e:2x2x1
jax: 0.10.0
libtpu: 0.0.40
codegen_flags: <defaults>
</compile_context>

<pallas_src>
import functools

import jax
import jax.numpy as jnp
from jax.experimental import pallas as pl
from jax.experimental.pallas import tpu as pltpu


def _round_up(v, m):
    return (v + m - 1) // m * m


def _pick_spatial_tile(S, tn_target, min_blocks=1):
    """Pick a lane-dense spatial tile: multiple of 128 dividing round_up(S,128)."""
    S128 = _round_up(S, 128)
    nb = S128 // 128                      # number of 128-lane groups
    max_d = max(1, tn_target // 128)
    best = 1
    for d in range(1, min(max_d, nb) + 1):
        if nb % d == 0 and nb // d >= min_blocks:
            best = d
    return 128 * best, S128               # (tn, S_pad); tn divides S_pad


# ----------------------------------------------------------------------------
# Pallas kernel: fused 1x1 conv (MXU) + sigmoid + YOLO decode, one spatial tile
# ----------------------------------------------------------------------------
def _detect_kernel(x_ref, w_ref, coef_ref, *out_refs, nx, tn, with_raw):
    if with_raw:
        raw_ref, dec_ref = out_refs
    else:
        (dec_ref,) = out_refs

    # 1x1 conv == matmul over input channels; bf16 operands, f32 accumulation.
    r = jnp.dot(w_ref[...], x_ref[0],
                preferred_element_type=jnp.float32)              # (Cp, tn)
    r = r + coef_ref[:, 5:6]                                     # + bias (Cp, 1)
    if with_raw:
        raw_ref[0] = r.astype(raw_ref.dtype)                     # bf16 raw conv out

    # Exact sigmoid on the EUP slot: 1 tanh + 2 VPU ops (VALU has slack).
    s = 0.5 + 0.5 * jnp.tanh(0.5 * r)                            # (Cp, tn)

    # Per-lane grid coordinates from the flattened spatial index.
    p = pl.program_id(1) * tn + jax.lax.broadcasted_iota(jnp.int32, (1, tn), 1)
    pf = p.astype(jnp.float32)
    fnx = jnp.float32(nx)
    gy = jnp.floor((pf + 0.5) / fnx)      # +0.5: robust to divide rounding
    gx = pf - gy * fnx
    # one-step fix-up guarantees the exact quotient even if the divide is off
    gy = jnp.where(gx < 0.0, gy - 1.0, jnp.where(gx >= fnx, gy + 1.0, gy))
    gx = pf - gy * fnx

    # Polynomial decode: dec = A*s + B*s^2 + (Cc + gx*GX + gy*GY)
    A = coef_ref[:, 0:1]
    B = coef_ref[:, 1:2]
    Cc = coef_ref[:, 2:3]
    GX = coef_ref[:, 3:4]
    GY = coef_ref[:, 4:5]
    dec_ref[0] = A * s + B * (s * s) + (Cc + gx * GX + gy * GY)


def detect_layer_pallas(x_nchw, w, b, anchors_l, stride_l, nc,
                        tn_target=1024, compute_dtype=jnp.bfloat16,
                        raw_dtype=jnp.bfloat16, with_raw=True):
    """One detection level.

    x_nchw: (bs, ci, ny, nx) f32, w: (C, ci) f32 (1x1 conv weight), b: (C,) f32.
    Returns (z, x_out): z (bs, na*ny*nx, no) decoded boxes; x_out (bs, na, ny, nx, no)
    raw pre-sigmoid conv output (None when with_raw=False).
    """
    bs, ci, ny, nx = x_nchw.shape
    na = anchors_l.shape[0]
    no = nc + 6
    C = na * no
    Cp = _round_up(C, 16)                  # bf16 sublane packing (zero rows, sliced off)
    S = ny * nx
    # v7x: make sure a single-batch call still has >= 2 parallel grid steps.
    min_blocks = 2 if bs == 1 else 1
    tn, S_pad = _pick_spatial_tile(S, tn_target, min_blocks)

    # --- glue: layout (reshape only, no HBM transpose) + bf16 cast ----------
    xr = x_nchw.reshape(bs, ci, S)
    if S_pad != S:
        xr = jnp.pad(xr, ((0, 0), (0, 0), (0, S_pad - S)))
    x_p = xr.astype(compute_dtype)

    w_p = w
    if Cp != C:
        w_p = jnp.pad(w_p, ((0, Cp - C), (0, 0)))
    w_p = w_p.astype(compute_dtype)

    # --- glue: per-output-channel decode coefficients -----------------------
    # channel c = a*no + k:
    #   xy  (k<2)   : (2s - 0.5 + g) * stride
    #   wh  (2<=k<4): (2s)^2 * anchor
    #   ang (k==4)  : 45*s - (45 if a < 4 else 0)
    #   else        : s
    # collapsed into  dec = A*s + B*s^2 + Cc + gx*GX + gy*GY
    f32 = jnp.float32
    stride = float(stride_l)
    c_idx = jnp.arange(C)
    k = c_idx % no
    a = c_idx // no
    is_xy = (k < 2).astype(f32)
    is_wh = ((k >= 2) & (k < 4)).astype(f32)
    is_ang = (k == 4).astype(f32)
    other = 1.0 - is_xy - is_wh - is_ang
    selx = (k == 0).astype(f32)
    sely = (k == 1).astype(f32)
    anc = jnp.where(is_wh > 0, anchors_l[a, jnp.clip(k - 2, 0, 1)], 0.0)
    angoff = jnp.where((k == 4) & (a < 4), 45.0, 0.0).astype(f32)
    A = 2.0 * stride * is_xy + 45.0 * is_ang + other
    B = 4.0 * anc
    Cc = -0.5 * stride * is_xy - angoff
    GX = stride * selx
    GY = stride * sely
    coef = jnp.stack([A, B, Cc, GX, GY, b.astype(f32)], axis=1)   # (C, 6)
    if Cp != C:
        coef = jnp.pad(coef, ((0, Cp - C), (0, 0)))

    kernel = functools.partial(_detect_kernel, nx=nx, tn=tn, with_raw=with_raw)

    out_shapes = []
    out_specs = []
    if with_raw:
        out_shapes.append(jax.ShapeDtypeStruct((bs, Cp, S_pad), raw_dtype))
        out_specs.append(pl.BlockSpec((1, Cp, tn), lambda bi, j: (bi, 0, j)))
    out_shapes.append(jax.ShapeDtypeStruct((bs, Cp, S_pad), jnp.float32))
    out_specs.append(pl.BlockSpec((1, Cp, tn), lambda bi, j: (bi, 0, j)))

    outs = pl.pallas_call(
        kernel,
        out_shape=tuple(out_shapes),
        grid_spec=pltpu.PrefetchScalarGridSpec(
            num_scalar_prefetch=0,
            grid=(bs, S_pad // tn),
            in_specs=[
                pl.BlockSpec((1, ci, tn), lambda bi, j: (bi, 0, j)),  # activations
                pl.BlockSpec((Cp, ci), lambda bi, j: (0, 0)),         # conv weight (resident)
                pl.BlockSpec((Cp, 6), lambda bi, j: (0, 0)),          # decode coeffs + bias
            ],
            out_specs=out_specs,
        ),
        compiler_params=pltpu.CompilerParams(
            dimension_semantics=("parallel", "parallel"),
            vmem_limit_bytes=32 * 1024 * 1024),
    )(x_p, w_p, coef)

    if with_raw:
        raw_out, dec_out = outs
    else:
        dec_out = outs[0]

    # --- glue: strip pads BEFORE any reshape, then PyTorch layout -----------
    dec = dec_out[:, :C, :S]
    dec5 = dec.reshape(bs, na, no, ny, nx).transpose(0, 1, 3, 4, 2)  # (bs,na,ny,nx,no)
    z = dec5.reshape(bs, na * ny * nx, no)

    if with_raw:
        raw = raw_out[:, :C, :S]
        raw5 = raw.reshape(bs, na, no, ny, nx).transpose(0, 1, 3, 4, 2)
        # TODO(synk): at pure inference the raw x_out is only carried through;
        # call with with_raw=False to drop this output and its transpose.
        return z, raw5
    return z, None


def detect_forward(xs, weights, biases, anchors, strides, nc,
                   tn_target=1024, compute_dtype=jnp.bfloat16,
                   raw_dtype=jnp.bfloat16, with_raw=True):
    """Inference-mode Detect.forward: returns (cat(z, 1), [x_i reshaped])."""
    zs, xouts = [], []
    for i in range(len(xs)):
        z, xo = detect_layer_pallas(xs[i], weights[i], biases[i],
                                    anchors[i], strides[i], nc,
                                    tn_target=tn_target,
                                    compute_dtype=compute_dtype,
                                    raw_dtype=raw_dtype,
                                    with_raw=with_raw)
        zs.append(z)
        xouts.append(xo)
    return jnp.concatenate(zs, axis=1), xouts


# ----------------------------------------------------------------------------
# Pure-JAX reference (mirrors the PyTorch forward) for the correctness check
# ----------------------------------------------------------------------------
def _ref_layer(x_nchw, w, b, anchors_l, stride_l, nc, compute_dtype=jnp.bfloat16):
    bs, ci, ny, nx = x_nchw.shape
    na = anchors_l.shape[0]
    no = nc + 6
    out = jnp.einsum("bchw,oc->bohw",
                     x_nchw.astype(compute_dtype), w.astype(compute_dtype),
                     preferred_element_type=jnp.float32) + b[None, :, None, None]
    xi = out.reshape(bs, na, no, ny, nx).transpose(0, 1, 3, 4, 2)
    y = jax.nn.sigmoid(xi)
    yy, xx = jnp.meshgrid(jnp.arange(ny), jnp.arange(nx), indexing="ij")
    grid = jnp.stack([xx, yy], -1).astype(jnp.float32)[None, None]
    xy = (y[..., 0:2] * 2.0 - 0.5 + grid) * stride_l
    wh = (y[..., 2:4] * 2.0) ** 2 * anchors_l[None, :, None, None, :]
    angoff = jnp.where(jnp.arange(na) < 4, 45.0, 0.0)[None, :, None, None, None]
    ang = y[..., 4:5] * 45.0 - angoff
    rest = y[..., 5:]
    ydec = jnp.concatenate([xy, wh, ang, rest], axis=-1)
    return ydec.reshape(bs, -1, no), xi


if __name__ == "__main__":
    key = jax.random.PRNGKey(0)

    # Small, shape-consistent config: nl=2 levels, na=3 anchors, nc=2 classes.
    nc = 2
    no = nc + 6
    anchors = jnp.asarray([[10., 13., 16., 30., 33., 23.],
                           [30., 61., 62., 45., 59., 119.]],
                          jnp.float32).reshape(2, 3, 2)          # (nl, na, 2)
    na = anchors.shape[1]
    strides = [8.0, 16.0]
    ch = (4, 8)
    bs = 2
    spatial = [(16, 16), (8, 8)]

    keys = jax.random.split(key, 8)
    xs, weights, biases = [], [], []
    for i, (ci, (ny, nx)) in enumerate(zip(ch, spatial)):
        xs.append(jax.random.normal(keys[2 * i], (bs, ci, ny, nx), jnp.float32))
        weights.append(0.1 * jax.random.normal(keys[2 * i + 1], (na * no, ci),
                                               jnp.float32))
        biases.append(0.01 * jnp.arange(na * no, dtype=jnp.float32))

    z_cat, x_out = detect_forward(xs, weights, biases, anchors, strides, nc)
    jax.block_until_ready(z_cat)
    jax.block_until_ready(x_out)

    # Reference (same bf16-cast conv inputs + f32 accumulation as the kernel).
    z_refs, x_refs = [], []
    for i in range(len(xs)):
        zr, xr = _ref_layer(xs[i], weights[i], biases[i], anchors[i],
                            strides[i], nc)
        z_refs.append(zr)
        x_refs.append(xr)
    z_ref_cat = jnp.concatenate(z_refs, axis=1)

    assert z_cat.shape == (bs, na * (16 * 16 + 8 * 8), no)
    # Raw conv output (training-mode x[i]): kernel emits bf16 to cut HBM
    # writeback, so compare at bf16-level tolerance.
    for a_out, r_out in zip(x_out, x_refs):
        assert a_out.shape == r_out.shape
        assert jnp.allclose(a_out.astype(jnp.float32), r_out,
                            rtol=2e-2, atol=2e-2)
    # Decoded z: f32 with an exact tanh-form sigmoid; only tiny matmul-order /
    # transcendental-implementation differences remain.
    assert jnp.allclose(z_cat, z_ref_cat, rtol=2e-3, atol=2e-2)

    print("KERNEL_OK")
</pallas_src>

<mosaic_0001>
module attributes {stable_mosaic.version = 11 : i64} {
  func.func @_detect_kernel(%arg0: i32, %arg1: i32, %arg2: memref<1x4x256xbf16, #tpu.memory_space<vmem>>, %arg3: memref<32x4xbf16, #tpu.memory_space<vmem>>, %arg4: memref<32x6xf32, #tpu.memory_space<vmem>>, %arg5: memref<1x32x256xbf16, #tpu.memory_space<vmem>>, %arg6: memref<1x32x256xf32, #tpu.memory_space<vmem>>) attributes {dimension_semantics = [#tpu.dimension_semantics<parallel>, #tpu.dimension_semantics<parallel>], iteration_bounds = array<i64: 2, 1>, scalar_prefetch = 0 : i64, scratch_operands = 0 : i64, tpu.core_type = #tpu.core_type<tc>, window_params = [{transform_indices = @transform_0, window_bounds = array<i64: 1, 4, 256>}, {pipeline_mode = #tpu.pipeline_mode<synchronous>, transform_indices = @transform_1, window_bounds = array<i64: 32, 4>}, {pipeline_mode = #tpu.pipeline_mode<synchronous>, transform_indices = @transform_2, window_bounds = array<i64: 32, 6>}, {transform_indices = @transform_3, window_bounds = array<i64: 1, 32, 256>}, {transform_indices = @transform_4, window_bounds = array<i64: 1, 32, 256>}]} {
    %c0 = arith.constant 0 : index
    %c0_0 = arith.constant 0 : index
    %0 = vector.load %arg3[%c0, %c0_0] : memref<32x4xbf16, #tpu.memory_space<vmem>>, vector<32x4xbf16>
    %c0_1 = arith.constant 0 : index
    %c0_2 = arith.constant 0 : index
    %c0_3 = arith.constant 0 : index
    %1 = vector.load %arg2[%c0_1, %c0_2, %c0_3] : memref<1x4x256xbf16, #tpu.memory_space<vmem>>, vector<1x4x256xbf16>
    %2 = vector.shape_cast %1 : vector<1x4x256xbf16> to vector<4x256xbf16>
    %cst = arith.constant dense<0.000000e+00> : vector<32x256xf32>
    %3 = tpu.matmul %0, %2, %cst {dimension_numbers = #tpu.dot_dimension_numbers<[1], [0], [0], [1], [0, 0, 1, 1], [], []>} : vector<32x4xbf16>, vector<4x256xbf16>, vector<32x256xf32> -> vector<32x256xf32>
    %c0_4 = arith.constant 0 : index
    %c5 = arith.constant 5 : index
    %4 = vector.load %arg4[%c0_4, %c5] : memref<32x6xf32, #tpu.memory_space<vmem>>, vector<32x1xf32>
    %5 = vector.broadcast %4 : vector<32x1xf32> to vector<32x256xf32>
    %6 = arith.addf %3, %5 : vector<32x256xf32>
    %7 = arith.truncf %6 : vector<32x256xf32> to vector<32x256xbf16>
    %c0_5 = arith.constant 0 : index
    %c0_6 = arith.constant 0 : index
    %c0_7 = arith.constant 0 : index
    %8 = vector.load %arg5[%c0_5, %c0_6, %c0_7] : memref<1x32x256xbf16, #tpu.memory_space<vmem>>, vector<1x32x256xbf16>
    %9 = vector.shape_cast %8 : vector<1x32x256xbf16> to vector<32x256xbf16>
    %10 = vector.shape_cast %7 : vector<32x256xbf16> to vector<1x32x256xbf16>
    tpu.vector_store %arg5[%c0_5, %c0_6, %c0_7], %10 {strides = array<i32>} : memref<1x32x256xbf16, #tpu.memory_space<vmem>>, vector<1x32x256xbf16>,
    %cst_8 = arith.constant 5.000000e-01 : f32
    %11 = vector.broadcast %cst_8 : f32 to vector<32x256xf32>
    %12 = arith.mulf %11, %6 : vector<32x256xf32>
    %13 = math.tanh %12 : vector<32x256xf32>
    %cst_9 = arith.constant 5.000000e-01 : f32
    %14 = vector.broadcast %cst_9 : f32 to vector<32x256xf32>
    %15 = arith.mulf %14, %13 : vector<32x256xf32>
    %cst_10 = arith.constant 5.000000e-01 : f32
    %16 = vector.broadcast %cst_10 : f32 to vector<32x256xf32>
    %17 = arith.addf %16, %15 : vector<32x256xf32>
    %c256_i32 = arith.constant 256 : i32
    %18 = arith.muli %arg1, %c256_i32 : i32
    %19 = tpu.iota {dimensions = array<i32: 1>} : vector<1x256xi32>
    %20 = vector.broadcast %18 : i32 to vector<1x256xi32>
    %21 = arith.addi %20, %19 : vector<1x256xi32>
    %22 = arith.sitofp %21 : vector<1x256xi32> to vector<1x256xf32>
    %cst_11 = arith.constant 5.000000e-01 : f32
    %23 = vector.broadcast %cst_11 : f32 to vector<1x256xf32>
    %24 = arith.addf %22, %23 : vector<1x256xf32>
    %cst_12 = arith.constant 1.600000e+01 : f32
    %25 = vector.broadcast %cst_12 : f32 to vector<1x256xf32>
    %26 = arith.divf %24, %25 : vector<1x256xf32>
    %27 = math.floor %26 : vector<1x256xf32>
    %cst_13 = arith.constant 1.600000e+01 : f32
    %28 = vector.broadcast %cst_13 : f32 to vector<1x256xf32>
    %29 = arith.mulf %27, %28 : vector<1x256xf32>
    %30 = arith.subf %22, %29 : vector<1x256xf32>
    %cst_14 = arith.constant 0.000000e+00 : f32
    %31 = vector.broadcast %cst_14 : f32 to vector<1x256xf32>
    %32 = arith.cmpf olt, %30, %31 : vector<1x256xf32>
    %cst_15 = arith.constant 1.000000e+00 : f32
    %33 = vector.broadcast %cst_15 : f32 to vector<1x256xf32>
    %34 = arith.subf %27, %33 : vector<1x256xf32>
    %cst_16 = arith.constant 1.600000e+01 : f32
    %35 = vector.broadcast %cst_16 : f32 to vector<1x256xf32>
    %36 = arith.cmpf oge, %30, %35 : vector<1x256xf32>
    %cst_17 = arith.constant 1.000000e+00 : f32
    %37 = vector.broadcast %cst_17 : f32 to vector<1x256xf32>
    %38 = arith.addf %27, %37 : vector<1x256xf32>
    %39 = arith.select %36, %38, %27 : vector<1x256xi1>, vector<1x256xf32>
    %40 = arith.select %32, %34, %39 : vector<1x256xi1>, vector<1x256xf32>
    %cst_18 = arith.constant 1.600000e+01 : f32
    %41 = vector.broadcast %cst_18 : f32 to vector<1x256xf32>
    %42 = arith.mulf %40, %41 : vector<1x256xf32>
    %43 = arith.subf %22, %42 : vector<1x256xf32>
    %c0_19 = arith.constant 0 : index
    %c0_20 = arith.constant 0 : index
    %44 = vector.load %arg4[%c0_19, %c0_20] : memref<32x6xf32, #tpu.memory_space<vmem>>, vector<32x1xf32>
    %c0_21 = arith.constant 0 : index
    %c1 = arith.constant 1 : index
    %45 = vector.load %arg4[%c0_21, %c1] : memref<32x6xf32, #tpu.memory_space<vmem>>, vector<32x1xf32>
    %c0_22 = arith.constant 0 : index
    %c2 = arith.constant 2 : index
    %46 = vector.load %arg4[%c0_22, %c2] : memref<32x6xf32, #tpu.memory_space<vmem>>, vector<32x1xf32>
    %c0_23 = arith.constant 0 : index
    %c3 = arith.constant 3 : index
    %47 = vector.load %arg4[%c0_23, %c3] : memref<32x6xf32, #tpu.memory_space<vmem>>, vector<32x1xf32>
    %c0_24 = arith.constant 0 : index
    %c4 = arith.constant 4 : index
    %48 = vector.load %arg4[%c0_24, %c4] : memref<32x6xf32, #tpu.memory_space<vmem>>, vector<32x1xf32>
    %49 = vector.broadcast %44 : vector<32x1xf32> to vector<32x256xf32>
    %50 = arith.mulf %49, %17 : vector<32x256xf32>
    %51 = arith.mulf %17, %17 : vector<32x256xf32>
    %52 = vector.broadcast %45 : vector<32x1xf32> to vector<32x256xf32>
    %53 = arith.mulf %52, %51 : vector<32x256xf32>
    %54 = arith.addf %50, %53 : vector<32x256xf32>
    %55 = vector.broadcast %43 : vector<1x256xf32> to vector<32x256xf32>
    %56 = vector.broadcast %47 : vector<32x1xf32> to vector<32x256xf32>
    %57 = arith.mulf %55, %56 : vector<32x256xf32>
    %58 = vector.broadcast %46 : vector<32x1xf32> to vector<32x256xf32>
    %59 = arith.addf %58, %57 : vector<32x256xf32>
    %60 = vector.broadcast %40 : vector<1x256xf32> to vector<32x256xf32>
    %61 = vector.broadcast %48 : vector<32x1xf32> to vector<32x256xf32>
    %62 = arith.mulf %60, %61 : vector<32x256xf32>
    %63 = arith.addf %59, %62 : vector<32x256xf32>
    %64 = arith.addf %54, %63 : vector<32x256xf32>
    %c0_25 = arith.constant 0 : index
    %c0_26 = arith.constant 0 : index
    %c0_27 = arith.constant 0 : index
    %65 = vector.load %arg6[%c0_25, %c0_26, %c0_27] : memref<1x32x256xf32, #tpu.memory_space<vmem>>, vector<1x32x256xf32>
    %66 = vector.shape_cast %65 : vector<1x32x256xf32> to vector<32x256xf32>
    %67 = vector.shape_cast %64 : vector<32x256xf32> to vector<1x32x256xf32>
    tpu.vector_store %arg6[%c0_25, %c0_26, %c0_27], %67 {strides = array<i32>} : memref<1x32x256xf32, #tpu.memory_space<vmem>>, vector<1x32x256xf32>,
    return
  }
  func.func @transform_0(%arg0: i32, %arg1: i32) -> (i32, i32, i32) {
    %c0_i32 = arith.constant 0 : i32
    %c0_i32_0 = arith.constant 0 : i32
    return %arg0, %c0_i32, %arg1 : i32, i32, i32
  }
  func.func @transform_1(%arg0: i32, %arg1: i32) -> (i32, i32) {
    %c0_i32 = arith.constant 0 : i32
    %c0_i32_0 = arith.constant 0 : i32
    %c0_i32_1 = arith.constant 0 : i32
    return %c0_i32, %c0_i32_0 : i32, i32
  }
  func.func @transform_2(%arg0: i32, %arg1: i32) -> (i32, i32) {
    %c0_i32 = arith.constant 0 : i32
    %c0_i32_0 = arith.constant 0 : i32
    %c0_i32_1 = arith.constant 0 : i32
    return %c0_i32, %c0_i32_0 : i32, i32
  }
  func.func @transform_3(%arg0: i32, %arg1: i32) -> (i32, i32, i32) {
    %c0_i32 = arith.constant 0 : i32
    %c0_i32_0 = arith.constant 0 : i32
    return %arg0, %c0_i32, %arg1 : i32, i32, i32
  }
  func.func @transform_4(%arg0: i32, %arg1: i32) -> (i32, i32, i32) {
    %c0_i32 = arith.constant 0 : i32
    %c0_i32_0 = arith.constant 0 : i32
    return %arg0, %c0_i32, %arg1 : i32, i32, i32
  }
}

</mosaic_0001>

<llo_original>
// kernel: tpu_custom_call.1
$region0: #{tpu_custom_call.1}
  #allocation0 [shape = 'u32[]', space=smem, size = 0x4, offset = 0x4, fixed_abs, tag = 'smem constant byte address 0x4 - core index']
  #allocation1 [shape = 'u32[144,128]{1,0:T(1,128)}', space=vmem, size = 0x12000, scoped, tag = 'internal scratch']
  %s0 = inlined_call_operand.vmem [shape: bf16[2,4,256], index: 0, kind: input, shape index: {}]
  %s1 = inlined_call_operand.vmem [shape: bf16[32,4], index: 1, kind: input, shape index: {}]
  %s2 = inlined_call_operand.vmem [shape: f32[32,6], index: 2, kind: input, shape index: {}]
  %s3 = inlined_call_operand.hbm [shape: bf16[2,32,256], index: 3, kind: output, shape index: {0}]
  %s4 = inlined_call_operand.hbm [shape: f32[2,32,256], index: 4, kind: output, shape index: {1}]
  %5 = xla_tuple %s3, %s4
  %s6 = sld [smem:[#allocation0]]
  $region53: #{tpu_custom_call.1} parent=0
    _
  %s8 = ssub.s32 1, %s6
  %s9 = scalar_select 0, %s8, %s6
  $region1: #{tpu_custom_call.1} parent=0
    #allocation2 [shape = 'u8[32768]{0}', space=vmem, size = 0x8000, scoped, tag = 'output window, operand 0']
    #allocation3 [shape = 's32[2]{0}', space=sflag, size = 0x8, scoped, tag = 'scoped memory for tpu_custom_call.1']
    #allocation4 [shape = 'u8[65536]{0}', space=vmem, size = 0x10000, scoped, tag = 'output window, operand 1']
    #allocation5 [shape = 's32[2]{0}', space=sflag, size = 0x8, scoped, tag = 'scoped memory for tpu_custom_call.1']
    %10 = vsyncpa [#allocation3], 0
    %s11 = scalar_lea.sflag [#allocation3], 1
    %12 = vsyncpa %s11, 0
    %13 = vsyncpa [#allocation5], 0
    %s14 = scalar_lea.sflag [#allocation5], 1
    %15 = vsyncpa %s14, 0
    loop: start=0, step=1, limit=4
    $region2: #{tpu_custom_call.1} parent=1 // loop_pre_header
      _
    $region3: #{tpu_custom_call.1} parent=1 // loop_header
      %s17 = sphi 0, %s21
      %p18 = scmp.ge.s32.totalorder %s17, 4
      %s24 = sphi 0, %s36
      %s25 = sphi 0, %s32
      %s26 = sphi 0, %s24
      %s27 = sphi 0, %s25
      %s28 = sphi 0, %s26
      %s29 = sphi 0, %s27
      %s41 = sphi 0, %s43
      %s44 = sphi 0, %s41
      %s45 = sphi 0, %s44
      %s61 = sphi 0, %s45
      %s65 = sphi 0, %s65
      %s67 = sphi 0, %s65
      %s68 = sphi 0, %s67
      %s82 = sphi 0, %s68
      %s86 = sphi 0, %s86
      %s88 = sphi 0, %s86
      %s89 = sphi 0, %s88
      %s103 = sphi 0, %s89
      %s111 = sphi 0, %s113
      %s114 = sphi 0, %s111
      %s115 = sphi 0, %s114
      %s131 = sphi 0, %s115
      %s139 = sphi 0, %s141
      %s142 = sphi 0, %s139
      %s143 = sphi 0, %s142
      %s159 = sphi 0, %s143
    $region4: #{tpu_custom_call.1} parent=1 // loop_header_branch
      %20 = sbr.rel (%p18) target = $region8
    $region5: #{tpu_custom_call.1} parent=1 // loop_body
      %s22 = ssub.s32 %s17, 1
      %s23 = ssub.s32 %s17, 2
      %s30 = sadd.s32 1, %s25
      %p31 = scmp.ge.s32.totalorder %s30, 1
      %s32 = scalar_select %p31, 0, %s30
      %s33 = sadd.s32 1, %s24
      %s34 = scalar_select %p31, %s33, %s24
      %p35 = scmp.ge.s32.totalorder %s34, 2
      %s36 = scalar_select %p35, 0, %s34
      %s37 = ssub.s32 %s24, %s36
      %s38 = ssub.s32 %s25, %s32
      %s39 = sor.u32 %s37, %s38
      %p40 = scmp.eq.s32.totalorder %s39, 0
      %s42 = sadd.s32 %s41, 1
      %s43 = scalar_select %p40, %s41, %s42
      %p46 = pneg %p40
      %p47 = scmp.eq.s32.totalorder %s17, 1
      %p48 = por %p46, %p47
      %p49 = scmp.ne.s32.totalorder %s41, %s44
      %p50 = scmp.eq.s32.totalorder %s17, 0
      %p51 = por %p49, %p50
      %p52 = scmp.ne.s32.totalorder %s41, %s44
      %p53 = scmp.eq.s32.totalorder %s22, 1
      %p54 = por %p52, %p53
      %p55 = scmp.ne.s32.totalorder %s44, %s45
      %p56 = scmp.eq.s32.totalorder %s22, 0
      %p57 = por %p55, %p56
      %p58 = scmp.ne.s32.totalorder %s44, %s45
      %p59 = scmp.eq.s32.totalorder %s23, 1
      %p60 = por %p58, %p59
      %p62 = scmp.ne.s32.totalorder %s45, %s61
      %p63 = scmp.eq.s32.totalorder %s23, 0
      %p64 = por %p62, %p63
      %s66 = sadd.s32 %s65, 1
      %p69 = scmp.eq.s32.totalorder %s17, 1
      %p70 = scmp.ne.s32.totalorder %s65, %s67
      %p71 = scmp.eq.s32.totalorder %s17, 0
      %p72 = por %p70, %p71
      %p73 = scmp.ne.s32.totalorder %s65, %s67
      %p74 = scmp.eq.s32.totalorder %s22, 1
      %p75 = por %p73, %p74
      %p76 = scmp.ne.s32.totalorder %s67, %s68
      %p77 = scmp.eq.s32.totalorder %s22, 0
      %p78 = por %p76, %p77
      %p79 = scmp.ne.s32.totalorder %s67, %s68
      %p80 = scmp.eq.s32.totalorder %s23, 1
      %p81 = por %p79, %p80
      %p83 = scmp.ne.s32.totalorder %s68, %s82
      %p84 = scmp.eq.s32.totalorder %s23, 0
      %p85 = por %p83, %p84
      %s87 = sadd.s32 %s86, 1
      %p90 = scmp.eq.s32.totalorder %s17, 1
      %p91 = scmp.ne.s32.totalorder %s86, %s88
      %p92 = scmp.eq.s32.totalorder %s17, 0
      %p93 = por %p91, %p92
      %p94 = scmp.ne.s32.totalorder %s86, %s88
      %p95 = scmp.eq.s32.totalorder %s22, 1
      %p96 = por %p94, %p95
      %p97 = scmp.ne.s32.totalorder %s88, %s89
      %p98 = scmp.eq.s32.totalorder %s22, 0
      %p99 = por %p97, %p98
      %p100 = scmp.ne.s32.totalorder %s88, %s89
      %p101 = scmp.eq.s32.totalorder %s23, 1
      %p102 = por %p100, %p101
      %p104 = scmp.ne.s32.totalorder %s89, %s103
      %p105 = scmp.eq.s32.totalorder %s23, 0
      %p106 = por %p104, %p105
      %s107 = ssub.s32 %s24, %s36
      %s108 = ssub.s32 %s25, %s32
      %s109 = sor.u32 %s107, %s108
      %p110 = scmp.eq.s32.totalorder %s109, 0
      %s112 = sadd.s32 %s111, 1
      %s113 = scalar_select %p110, %s111, %s112
      %p116 = pneg %p110
      %p117 = scmp.eq.s32.totalorder %s17, 1
      %p118 = por %p116, %p117
      %p119 = scmp.ne.s32.totalorder %s111, %s114
      %p120 = scmp.eq.s32.totalorder %s17, 0
      %p121 = por %p119, %p120
      %p122 = scmp.ne.s32.totalorder %s111, %s114
      %p123 = scmp.eq.s32.totalorder %s22, 1
      %p124 = por %p122, %p123
      %p125 = scmp.ne.s32.totalorder %s114, %s115
      %p126 = scmp.eq.s32.totalorder %s22, 0
      %p127 = por %p125, %p126
      %p128 = scmp.ne.s32.totalorder %s114, %s115
      %p129 = scmp.eq.s32.totalorder %s23, 1
      %p130 = por %p128, %p129
      %p132 = scmp.ne.s32.totalorder %s115, %s131
      %p133 = scmp.eq.s32.totalorder %s23, 0
      %p134 = por %p132, %p133
      %s135 = ssub.s32 %s24, %s36
      %s136 = ssub.s32 %s25, %s32
      %s137 = sor.u32 %s135, %s136
      %p138 = scmp.eq.s32.totalorder %s137, 0
      %s140 = sadd.s32 %s139, 1
      %s141 = scalar_select %p138, %s139, %s140
      %p144 = pneg %p138
      %p145 = scmp.eq.s32.totalorder %s17, 1
      %p146 = por %p144, %p145
      %p147 = scmp.ne.s32.totalorder %s139, %s142
      %p148 = scmp.eq.s32.totalorder %s17, 0
      %p149 = por %p147, %p148
      %p150 = scmp.ne.s32.totalorder %s139, %s142
      %p151 = scmp.eq.s32.totalorder %s22, 1
      %p152 = por %p150, %p151
      %p153 = scmp.ne.s32.totalorder %s142, %s143
      %p154 = scmp.eq.s32.totalorder %s22, 0
      %p155 = por %p153, %p154
      %p156 = scmp.ne.s32.totalorder %s142, %s143
      %p157 = scmp.eq.s32.totalorder %s23, 1
      %p158 = por %p156, %p157
      %p160 = scmp.ne.s32.totalorder %s143, %s159
      %p161 = scmp.eq.s32.totalorder %s23, 0
      %p162 = por %p160, %p161
      %p163 = scmp.le.s32.totalorder 1, %s17
      %p164 = scmp.lt.s32.totalorder %s17, 3
      %p165 = pnand %p163, %p164
      %p166 = pneg %p165
      // Predicated region
      $region9: #{tpu_custom_call.1} parent=5 // pred_check
        _
      $region10: #{tpu_custom_call.1} parent=5 // pred_check_branch
        %168 = sbr.rel (%p165) target = $region12
      $region11: #{tpu_custom_call.1} parent=5 // pred_region
        %s169 = ssub.s32 %s17, 1
        // Predicated region
        $region13: #{tpu_custom_call.1} parent=11 // pred_check
          %p170 = pneg %p78
        $region14: #{tpu_custom_call.1} parent=11 // pred_check_branch
          %172 = sbr.rel (%p170) target = $region16
        $region15: #{tpu_custom_call.1} parent=11 // pred_region
          _
        $region16: #{tpu_custom_call.1} parent=11 // pred_fallthru
          _
        // Predicated region
        $region17: #{tpu_custom_call.1} parent=11 // pred_check
          %p173 = pneg %p99
        $region18: #{tpu_custom_call.1} parent=11 // pred_check_branch
          %175 = sbr.rel (%p173) target = $region20
        $region19: #{tpu_custom_call.1} parent=11 // pred_region
          _
        $region20: #{tpu_custom_call.1} parent=11 // pred_fallthru
          _
      $region12: #{tpu_custom_call.1} parent=5 // pred_fallthru
        _
      %p176 = scmp.lt.s32.totalorder %s17, 2
      // Predicated region
      $region21: #{tpu_custom_call.1} parent=5 // pred_check
        %p177 = pneg %p176
      $region22: #{tpu_custom_call.1} parent=5 // pred_check_branch
        %179 = sbr.rel (%p177) target = $region24
      $region23: #{tpu_custom_call.1} parent=5 // pred_region
        // Predicated region
        $region25: #{tpu_custom_call.1} parent=23 // pred_check
          %p180 = pneg %p51
        $region26: #{tpu_custom_call.1} parent=23 // pred_check_branch
          %182 = sbr.rel (%p180) target = $region28
        $region27: #{tpu_custom_call.1} parent=23 // pred_region
          %s183 = smul.u32 2, %s25
          %p184 = scmp.lt.s32.totalorder %s24, 1
          %s185 = scalar_select %p184, %s24, 1
          %p186 = scmp.lt.s32.totalorder %s183, 1
          %s187 = scalar_select %p186, %s183, 1
          %s188 = smul.addr %s185, 2
          %s189 = sadd.s32 %s187, %s188
          %s190 = smul.addr %s189, 2
          %s191 = scalar_lea.vmem %s0, %s190
          %s192 = smul.u32 2, %s25
        $region28: #{tpu_custom_call.1} parent=23 // pred_fallthru
          _
      $region24: #{tpu_custom_call.1} parent=5 // pred_fallthru
        _
      %p193 = scmp.le.s32.totalorder 1, %s17
      %p194 = scmp.lt.s32.totalorder %s17, 3
      %p195 = pnand %p193, %p194
      %p196 = pneg %p195
      // Predicated region
      $region29: #{tpu_custom_call.1} parent=5 // pred_check
        _
      $region30: #{tpu_custom_call.1} parent=5 // pred_check_branch
        %198 = sbr.rel (%p195) target = $region32
      $region31: #{tpu_custom_call.1} parent=5 // pred_region
        %s199 = ssub.s32 %s17, 1
        %s200 = smul.u32 2, %s27
        %p201 = scmp.lt.s32.totalorder %s26, 1
        %s202 = scalar_select %p201, %s26, 1
        %p203 = scmp.lt.s32.totalorder %s200, 1
        %s204 = scalar_select %p203, %s200, 1
        %s205 = smul.addr %s202, 2
        %s206 = sadd.s32 %s204, %s205
        %s207 = smul.addr %s206, 2
        %s208 = scalar_lea.vmem %s0, %s207
        %p209 = pneg %p57
        %p210 = pneg %p54
        %p211 = pneg %p78
        %p212 = pneg %p75
        %p213 = pneg %p99
        %p214 = pneg %p96
        %p215 = pneg %p127
        %p216 = pneg %p124
        %s217 = sand.u32 %s114, 1
        %s218 = scalar_lea.sflag [#allocation3], %s217
        %s219 = sand.u32 %s114, 1
        %s220 = smul.addr %s219, 32
        %s221 = scalar_lea.vmem [#allocation2], %s220
        %p222 = pneg %p155
        %p223 = pneg %p152
        %s224 = sand.u32 %s142, 1
        %s225 = scalar_lea.sflag [#allocation5], %s224
        %s226 = sand.u32 %s142, 1
        %s227 = smul.addr %s226, 64
        %s228 = scalar_lea.vmem [#allocation4], %s227
        %s229 = smul.u32 2, %s27
        %p230 = scmp.lt.s32.totalorder %s26, 1
        %s231 = scalar_select %p230, %s26, 1
        %p232 = scmp.lt.s32.totalorder %s229, 1
        %s233 = scalar_select %p232, %s229, 1
        %s234 = smul.addr %s231, 2
        %s235 = sadd.s32 %s233, %s234
        %s236 = smul.addr %s235, 2
        %s237 = scalar_lea.vmem %s0, %s236
        %s238 = smul.u32 2, %s27
        %s239 = smul.u32 2, %s27
        %s240 = smul.u32 2, %s27
        %v242 = vld [vmem:[%s1] sm:$0xf]
        %v243 = vld [vmem:[%s1 + $0x4] sm:$0xf]
        %v244 = vld [vmem:[%s1 + $0x8] sm:$0xf]
        %v245 = vld [vmem:[%s1 + $0xc] sm:$0xf]
        %v246 = vld [vmem:[%s237] sm:$0xf]
        %v247 = vld [vmem:[%s2] sm:$0xff]
        %v248 = vld [vmem:[%s2 + $0x8] sm:$0xff]
        %v249 = vld [vmem:[%s2 + $0x10] sm:$0xff]
        %v250 = vld [vmem:[%s2 + $0x18] sm:$0xff]
        %252 = vset.pattern.permute.xlu0 5
        %253 = vperm.xlu0 %252, %v247
        %v254 = vpop.permute.xlu0 %253
        %257 = vset.pattern.permute.xlu0 5
        %258 = vperm.xlu0 %257, %v248
        %v259 = vpop.permute.xlu0 %258
        %262 = vset.pattern.permute.xlu0 5
        %263 = vperm.xlu0 %262, %v249
        %v264 = vpop.permute.xlu0 %263
        %267 = vset.pattern.permute.xlu0 5
        %268 = vperm.xlu0 %267, %v250
        %v269 = vpop.permute.xlu0 %268
        %v275 = vunpack.c.l.b16 %v242
        %v276 = vunpack.c.l.b16 %v243
        %v277 = vunpack.c.l.b16 %v244
        %v278 = vunpack.c.l.b16 %v245
        %v279 = vpack.c.b16 %v276, %v275
        %v280 = vpack.c.b16 %v278, %v277
        %v283 = vunpack.c.l.s4 1983009808
        %v284 = vunpack.c.0.s8 %v283
        %v285 = vlaneseq
        %v286 = vshrl.u32 %v285, 7
        %v287 = vsub.s32 %v284, %v286
        %v288 = vrot.slane %v246, %v287
        %v289 = vcombine.high %v288, %v288
        %vm290 = vcmask 31744
        %v292 = vsel %vm290, %v279, 0
        %v295 = vsel %vm290, %v280, 0
        %vm297 = vcmask 1041408
        %v299 = vsel %vm297, %v288, 0
        %v302 = vsel %vm297, %v289, 0
        %304 = vmatprep.subr.bf16.mxu0 0
        %305 = vmatpush1.bf16.msra.mxu0 0
        %306 = vmatprep.subr.bf16.mxu0 0
        %307 = vmatpush1.bf16.msra.mxu0 0
        %308 = vmatprep.subr.bf16.mxu0 0
        %309 = vmatpush1.bf16.msra.mxu0 0
        %310 = vmatprep.subr.bf16.mxu0 0
        %311 = vmatpush1.bf16.msra.mxu0 0
        %312 = vmatprep.subr.bf16.mxu0 0
        %313 = vmatpush1.bf16.msra.mxu0 0
        %314 = vmatprep.subr.bf16.mxu0 0
        %315 = vmatpush1.bf16.msra.mxu0 0
        %316 = vmatprep.subr.bf16.mxu0 0
        %317 = vmatpush1.bf16.msra.mxu0 0
        %318 = vmatprep.subr.bf16.mxu0 %v302
        %319 = vmatpush1.bf16.msra.mxu0 %v299
        %320 = vmatprep.subr.bf16.mxu0 0
        %321 = vmatpush2.bf16.msra.mxu0 0
        %322 = vmatprep.subr.bf16.mxu0 0
        %323 = vmatpush2.bf16.msra.mxu0 0
        %324 = vmatprep.subr.bf16.mxu0 0
        %325 = vmatpush2.bf16.msra.mxu0 0
        %326 = vmatprep.subr.bf16.mxu0 0
        %327 = vmatpush2.bf16.msra.mxu0 0
        %328 = vmatprep.subr.bf16.mxu0 0
        %329 = vmatpush2.bf16.msra.mxu0 0
        %330 = vmatprep.subr.bf16.mxu0 0
        %331 = vmatpush2.bf16.msra.mxu0 0
        %332 = vmatprep.subr.bf16.mxu0 0
        %333 = vmatpush2.bf16.msra.mxu0 0
        %334 = vmatprep.subr.bf16.mxu0 0
        %335 = vmatpush2.bf16.msra.mxu0 0
        %336 = vmatprep.mubr.bf16.mxu0 0
        %337 = vmatmul.mubr.bf16.gmra.mxu0 %v292
        %v338 = vpop.f32.mrf.mxu0
        %v339 = vadd.f32 %v254, %v338
        %v340 = vpop.f32.mrf.mxu0
        %v341 = vadd.f32 %v254, %v340
        %v342 = vpop.f32.mrf.mxu0
        %v343 = vadd.f32 %v259, %v342
        %v344 = vpop.f32.mrf.mxu0
        %v345 = vadd.f32 %v259, %v344
        %346 = vmatprep.mubr.bf16.mxu0 0
        %347 = vmatmul.mubr.bf16.gmra.mxu0 %v295
        %v348 = vpop.f32.mrf.mxu0
        %v349 = vadd.f32 %v264, %v348
        %v350 = vpop.f32.mrf.mxu0
        %v351 = vadd.f32 %v264, %v350
        %v352 = vpop.f32.mrf.mxu0
        %v353 = vadd.f32 %v269, %v352
        %v354 = vpop.f32.mrf.mxu0
        %v355 = vadd.f32 %v269, %v354
        %356 = vdwg.mxu0
        %v357 = vpack.c.bf16 %v343, %v339
        %v358 = vpack.c.bf16 %v345, %v341
        %v359 = vpack.c.bf16 %v353, %v349
        %v360 = vpack.c.bf16 %v355, %v351
        %v365 = vunpack.c.l.b16 %v357
        %v366 = vunpack.c.l.b16 %v358
        %v367 = vunpack.c.h.b16 %v357
        %v368 = vunpack.c.h.b16 %v358
        %v369 = vunpack.c.l.b16 %v359
        %v370 = vunpack.c.l.b16 %v360
        %v371 = vunpack.c.h.b16 %v359
        %v372 = vunpack.c.h.b16 %v360
        %v373 = vpack.c.b16 %v366, %v365
        %v374 = vpack.c.b16 %v368, %v367
        %v375 = vpack.c.b16 %v370, %v369
        %v376 = vpack.c.b16 %v372, %v371
        %381 = vst [vmem:[%s221] sm:$0xff] %v373
        %382 = vst [vmem:[%s221 + $0x8] sm:$0xff] %v374
        %383 = vst [vmem:[%s221 + $0x10] sm:$0xff] %v375
        %384 = vst [vmem:[%s221 + $0x18] sm:$0xff] %v376
        %v385 = vmul.f32 %v339, 0.5
        %v386 = vmul.f32 %v341, 0.5
        %v387 = vmul.f32 %v343, 0.5
        %v388 = vmul.f32 %v345, 0.5
        %v389 = vmul.f32 %v349, 0.5
        %v390 = vmul.f32 %v351, 0.5
        %v391 = vmul.f32 %v353, 0.5
        %v392 = vmul.f32 %v355, 0.5
        %v393 = vtanh.pop %v385
        %v394 = vtanh.pop %v386
        %v395 = vtanh.pop %v387
        %v396 = vtanh.pop %v388
        %v397 = vtanh.pop %v389
        %v398 = vtanh.pop %v390
        %v399 = vtanh.pop %v391
        %v400 = vtanh.pop %v392
        %v401 = vmul.f32 %v393, 0.5
        %v402 = vmul.f32 %v394, 0.5
        %v403 = vmul.f32 %v395, 0.5
        %v404 = vmul.f32 %v396, 0.5
        %v405 = vmul.f32 %v397, 0.5
        %v406 = vmul.f32 %v398, 0.5
        %v407 = vmul.f32 %v399, 0.5
        %v408 = vmul.f32 %v400, 0.5
        %v409 = vadd.f32 %v401, 0.5
        %v410 = vadd.f32 %v402, 0.5
        %v411 = vadd.f32 %v403, 0.5
        %v412 = vadd.f32 %v404, 0.5
        %v413 = vadd.f32 %v405, 0.5
        %v414 = vadd.f32 %v406, 0.5
        %v415 = vadd.f32 %v407, 0.5
        %v416 = vadd.f32 %v408, 0.5
        %s417 = smul.u32 %s27, 256
        %v418 = vlaneseq
        %v419 = vand.u32 %v418, 127
        %v420 = vadd.s32 %v419, 128
        %v421 = vstv %s417
        %v422 = vadd.s32 %v421, %v419
        %v423 = vadd.s32 %v421, %v420
        %v424 = vcvt.s32.f32 %v422
        %v425 = vcvt.s32.f32 %v423
        %v426 = vadd.f32 %v424, 0.5
        %v427 = vadd.f32 %v425, 0.5
        %v428 = vrcp.pop 16.0
        %v429 = vmul.f32 %v426, %v428
        %v430 = vmul.f32 %v427, %v428
        %v431 = vfloor.f32 %v429
        %v432 = vfloor.f32 %v430
        %v433 = vmul.f32 %v431, 16.0
        %v434 = vmul.f32 %v432, 16.0
        %v435 = vsub.f32 %v424, %v433
        %v436 = vsub.f32 %v425, %v434
        %vm437 = vcmp.lt.f32.partialorder %v435, 0.0
        %vm438 = vcmp.lt.f32.partialorder %v436, 0.0
        %v439 = vsub.f32 %v431, 1.0
        %v440 = vsub.f32 %v432, 1.0
        %vm441 = vcmp.ge.f32.partialorder %v435, 16.0
        %vm442 = vcmp.ge.f32.partialorder %v436, 16.0
        %v443 = vadd.f32 %v431, 1.0
        %v444 = vadd.f32 %v432, 1.0
        %v445 = vsel %vm441, %v443, %v431
        %v446 = vsel %vm442, %v444, %v432
        %v447 = vsel %vm437, %v439, %v445
        %v448 = vsel %vm438, %v440, %v446
        %v449 = vmul.f32 %v447, 16.0
        %v450 = vmul.f32 %v448, 16.0
        %v451 = vsub.f32 %v424, %v449
        %v452 = vsub.f32 %v425, %v450
        %v453 = vld [vmem:[%s2] sm:$0xff]
        %v454 = vld [vmem:[%s2 + $0x8] sm:$0xff]
        %v455 = vld [vmem:[%s2 + $0x10] sm:$0xff]
        %v456 = vld [vmem:[%s2 + $0x18] sm:$0xff]
        %458 = vset.pattern.permute.xlu0 0
        %459 = vperm.xlu0 %458, %v453
        %v460 = vpop.permute.xlu0 %459
        %463 = vset.pattern.permute.xlu0 0
        %464 = vperm.xlu0 %463, %v454
        %v465 = vpop.permute.xlu0 %464
        %468 = vset.pattern.permute.xlu0 0
        %469 = vperm.xlu0 %468, %v455
        %v470 = vpop.permute.xlu0 %469
        %473 = vset.pattern.permute.xlu0 0
        %474 = vperm.xlu0 %473, %v456
        %v475 = vpop.permute.xlu0 %474
        %v477 = vmul.f32 %v460, %v409
        %v478 = vmul.f32 %v460, %v410
        %v479 = vmul.f32 %v465, %v411
        %v480 = vmul.f32 %v465, %v412
        %v481 = vmul.f32 %v470, %v413
        %v482 = vmul.f32 %v470, %v414
        %v483 = vmul.f32 %v475, %v415
        %v484 = vmul.f32 %v475, %v416
        %v485 = vmul.f32 %v409, %v409
        %v486 = vmul.f32 %v410, %v410
        %v487 = vmul.f32 %v411, %v411
        %v488 = vmul.f32 %v412, %v412
        %v489 = vmul.f32 %v413, %v413
        %v490 = vmul.f32 %v414, %v414
        %v491 = vmul.f32 %v415, %v415
        %v492 = vmul.f32 %v416, %v416
        %493 = vset.pattern.permute.xlu0 1
        %494 = vperm.xlu0 %493, %v453
        %v495 = vpop.permute.xlu0 %494
        %497 = vset.pattern.permute.xlu0 1
        %498 = vperm.xlu0 %497, %v454
        %v499 = vpop.permute.xlu0 %498
        %501 = vset.pattern.permute.xlu0 1
        %502 = vperm.xlu0 %501, %v455
        %v503 = vpop.permute.xlu0 %502
        %505 = vset.pattern.permute.xlu0 1
        %506 = vperm.xlu0 %505, %v456
        %v507 = vpop.permute.xlu0 %506
        %v509 = vmul.f32 %v495, %v485
        %v510 = vmul.f32 %v495, %v486
        %v511 = vmul.f32 %v499, %v487
        %v512 = vmul.f32 %v499, %v488
        %v513 = vmul.f32 %v503, %v489
        %v514 = vmul.f32 %v503, %v490
        %v515 = vmul.f32 %v507, %v491
        %v516 = vmul.f32 %v507, %v492
        %v517 = vadd.f32 %v477, %v509
        %v518 = vadd.f32 %v478, %v510
        %v519 = vadd.f32 %v479, %v511
        %v520 = vadd.f32 %v480, %v512
        %v521 = vadd.f32 %v481, %v513
        %v522 = vadd.f32 %v482, %v514
        %v523 = vadd.f32 %v483, %v515
        %v524 = vadd.f32 %v484, %v516
        %525 = vset.pattern.permute.xlu0 3
        %526 = vperm.xlu0 %525, %v453
        %v527 = vpop.permute.xlu0 %526
        %529 = vset.pattern.permute.xlu0 3
        %530 = vperm.xlu0 %529, %v454
        %v531 = vpop.permute.xlu0 %530
        %533 = vset.pattern.permute.xlu0 3
        %534 = vperm.xlu0 %533, %v455
        %v535 = vpop.permute.xlu0 %534
        %537 = vset.pattern.permute.xlu0 3
        %538 = vperm.xlu0 %537, %v456
        %v539 = vpop.permute.xlu0 %538
        %v541 = vmul.f32 %v451, %v527
        %v542 = vmul.f32 %v452, %v527
        %v543 = vmul.f32 %v451, %v531
        %v544 = vmul.f32 %v452, %v531
        %v545 = vmul.f32 %v451, %v535
        %v546 = vmul.f32 %v452, %v535
        %v547 = vmul.f32 %v451, %v539
        %v548 = vmul.f32 %v452, %v539
        %549 = vset.pattern.permute.xlu0 2
        %550 = vperm.xlu0 %549, %v453
        %v551 = vpop.permute.xlu0 %550
        %553 = vset.pattern.permute.xlu0 2
        %554 = vperm.xlu0 %553, %v454
        %v555 = vpop.permute.xlu0 %554
        %557 = vset.pattern.permute.xlu0 2
        %558 = vperm.xlu0 %557, %v455
        %v559 = vpop.permute.xlu0 %558
        %561 = vset.pattern.permute.xlu0 2
        %562 = vperm.xlu0 %561, %v456
        %v563 = vpop.permute.xlu0 %562
        %v565 = vadd.f32 %v551, %v541
        %v566 = vadd.f32 %v551, %v542
        %v567 = vadd.f32 %v555, %v543
        %v568 = vadd.f32 %v555, %v544
        %v569 = vadd.f32 %v559, %v545
        %v570 = vadd.f32 %v559, %v546
        %v571 = vadd.f32 %v563, %v547
        %v572 = vadd.f32 %v563, %v548
        %573 = vset.pattern.permute.xlu0 4
        %574 = vperm.xlu0 %573, %v453
        %v575 = vpop.permute.xlu0 %574
        %577 = vset.pattern.permute.xlu0 4
        %578 = vperm.xlu0 %577, %v454
        %v579 = vpop.permute.xlu0 %578
        %581 = vset.pattern.permute.xlu0 4
        %582 = vperm.xlu0 %581, %v455
        %v583 = vpop.permute.xlu0 %582
        %585 = vset.pattern.permute.xlu0 4
        %586 = vperm.xlu0 %585, %v456
        %v587 = vpop.permute.xlu0 %586
        %v589 = vmul.f32 %v447, %v575
        %v590 = vmul.f32 %v448, %v575
        %v591 = vmul.f32 %v447, %v579
        %v592 = vmul.f32 %v448, %v579
        %v593 = vmul.f32 %v447, %v583
        %v594 = vmul.f32 %v448, %v583
        %v595 = vmul.f32 %v447, %v587
        %v596 = vmul.f32 %v448, %v587
        %v597 = vadd.f32 %v565, %v589
        %v598 = vadd.f32 %v566, %v590
        %v599 = vadd.f32 %v567, %v591
        %v600 = vadd.f32 %v568, %v592
        %v601 = vadd.f32 %v569, %v593
        %v602 = vadd.f32 %v570, %v594
        %v603 = vadd.f32 %v571, %v595
        %v604 = vadd.f32 %v572, %v596
        %v605 = vadd.f32 %v517, %v597
        %v606 = vadd.f32 %v518, %v598
        %v607 = vadd.f32 %v519, %v599
        %v608 = vadd.f32 %v520, %v600
        %v609 = vadd.f32 %v521, %v601
        %v610 = vadd.f32 %v522, %v602
        %v611 = vadd.f32 %v523, %v603
        %v612 = vadd.f32 %v524, %v604
        %613 = vst [vmem:[%s228] sm:$0xff] %v605
        %614 = vst [vmem:[%s228 + $0x8] sm:$0xff] %v606
        %615 = vst [vmem:[%s228 + $0x10] sm:$0xff] %v607
        %616 = vst [vmem:[%s228 + $0x18] sm:$0xff] %v608
        %617 = vst [vmem:[%s228 + $0x20] sm:$0xff] %v609
        %618 = vst [vmem:[%s228 + $0x28] sm:$0xff] %v610
        %619 = vst [vmem:[%s228 + $0x30] sm:$0xff] %v611
        %620 = vst [vmem:[%s228 + $0x38] sm:$0xff] %v612
        %s621 = sand.u32 %s114, 1
        %s622 = scalar_lea.sflag [#allocation3], %s621
        %s623 = sand.u32 %s114, 1
        %s624 = smul.addr %s623, 32
        %s625 = scalar_lea.vmem [#allocation2], %s624
        %s626 = sand.u32 %s142, 1
        %s627 = scalar_lea.sflag [#allocation5], %s626
        %s628 = sand.u32 %s142, 1
        %s629 = smul.addr %s628, 64
        %s630 = scalar_lea.vmem [#allocation4], %s629
        // Predicated region
        $region33: #{tpu_custom_call.1} parent=31 // pred_check
          %p631 = pneg %p124
        $region34: #{tpu_custom_call.1} parent=31 // pred_check_branch
          %633 = sbr.rel (%p631) target = $region36
        $region35: #{tpu_custom_call.1} parent=31 // pred_region
          %s634 = smul.u32 2, %s27
          %s636 = ssub.s32 512, 512
          %637 = vsyncadd %s622, %s636
          %s638 = smul.addr %s26, 8
          %s639 = sadd.s32 %s634, %s638
          %s640 = smul.addr %s639, 64
          %s641 = scalar_lea.hbm %s3, %s640
          %s642 = sshll.u32 %s625, 4
          %s643 = int_to_ptr.vmem [resolvable:$true] %s642
          %648 = dma.vmem_to_hbm [thread:$0]  %s643, 512, %s641, %s622, 128, 128, 8
        $region36: #{tpu_custom_call.1} parent=31 // pred_fallthru
          _
        // Predicated region
        $region37: #{tpu_custom_call.1} parent=31 // pred_check
          %p649 = pneg %p152
        $region38: #{tpu_custom_call.1} parent=31 // pred_check_branch
          %651 = sbr.rel (%p649) target = $region40
        $region39: #{tpu_custom_call.1} parent=31 // pred_region
          %s652 = smul.u32 2, %s27
          %s654 = ssub.s32 1024, 1024
          %655 = vsyncadd %s627, %s654
          %s656 = smul.addr %s26, 8
          %s657 = sadd.s32 %s652, %s656
          %s658 = smul.addr %s657, 128
          %s659 = scalar_lea.hbm %s4, %s658
          %s660 = sshll.u32 %s630, 4
          %s661 = int_to_ptr.vmem [resolvable:$true] %s660
          %666 = dma.vmem_to_hbm [thread:$0]  %s661, 1024, %s659, %s627, 256, 256, 16
        $region40: #{tpu_custom_call.1} parent=31 // pred_fallthru
          _
      $region32: #{tpu_custom_call.1} parent=5 // pred_fallthru
        _
      %p667 = scmp.le.s32.totalorder 2, %s17
      // Predicated region
      $region41: #{tpu_custom_call.1} parent=5 // pred_check
        %p668 = pneg %p667
      $region42: #{tpu_custom_call.1} parent=5 // pred_check_branch
        %670 = sbr.rel (%p668) target = $region44
      $region43: #{tpu_custom_call.1} parent=5 // pred_region
        %s671 = ssub.s32 %s17, 2
        // Predicated region
        $region45: #{tpu_custom_call.1} parent=43 // pred_check
          %p672 = pneg %p130
        $region46: #{tpu_custom_call.1} parent=43 // pred_check_branch
          %674 = sbr.rel (%p672) target = $region48
        $region47: #{tpu_custom_call.1} parent=43 // pred_region
          %s675 = sand.u32 %s115, 1
          %s676 = scalar_lea.sflag [#allocation3], %s675
          %s677 = sand.u32 %s115, 1
          %s678 = smul.addr %s677, 32
          %s679 = scalar_lea.vmem [#allocation2], %s678
          %680 = dma.done %s676, 512
        $region48: #{tpu_custom_call.1} parent=43 // pred_fallthru
          _
        // Predicated region
        $region49: #{tpu_custom_call.1} parent=43 // pred_check
          %p681 = pneg %p158
        $region50: #{tpu_custom_call.1} parent=43 // pred_check_branch
          %683 = sbr.rel (%p681) target = $region52
        $region51: #{tpu_custom_call.1} parent=43 // pred_region
          %s684 = sand.u32 %s143, 1
          %s685 = scalar_lea.sflag [#allocation5], %s684
          %s686 = sand.u32 %s143, 1
          %s687 = smul.addr %s686, 64
          %s688 = scalar_lea.vmem [#allocation4], %s687
          %689 = dma.done %s685, 1024
        $region52: #{tpu_custom_call.1} parent=43 // pred_fallthru
          _
      $region44: #{tpu_custom_call.1} parent=5 // pred_fallthru
        _
    $region6: #{tpu_custom_call.1} parent=1 // loop_footer
      %s21 = sadd.s32 1, %s17
    $region7: #{tpu_custom_call.1} parent=1 // loop_footer_branch
      %16 = sbr.rel target = $region3
    $region8: #{tpu_custom_call.1} parent=1 // loop_exit
      _
    %690 = vsyncpa [#allocation3], 1
    %s691 = scalar_lea.sflag [#allocation3], 1
    %692 = vsyncpa %s691, 1
    %693 = vsyncpa [#allocation5], 1
    %s694 = scalar_lea.sflag [#allocation5], 1
    %695 = vsyncpa %s694, 1

</llo_original>
